<compile_context>
chip_gen: v7x
topology: tpu7x:2x2x1
jax: 0.10.0
libtpu: 0.0.40
codegen_flags: <defaults>
</compile_context>

<pallas_src>
import jax
import jax.numpy as jnp
from jax.experimental import pallas as pl
from jax.experimental.pallas import tpu as pltpu


# --------------------------------------------------------------------------
# Pallas kernel: all encoder levels fused into one kernel invocation.
# refs = (p_0, w_0, b_0, ..., p_{n-1}, w_{n-1}, b_{n-1}, o_0, ..., o_{n-1})
# --------------------------------------------------------------------------
def _multi_level_kernel(*refs):
    n_levels = len(refs) // 4
    for i in range(n_levels):
        p_ref = refs[3 * i + 0]   # (M_i, K_i)  bf16 patches
        w_ref = refs[3 * i + 1]   # (K_i, N_i)  bf16 fused block-diagonal weights
        b_ref = refs[3 * i + 2]   # (1,  N_i)   f32 bias
        o_ref = refs[3 * n_levels + i]  # (M_i, N_i) f32 output
        y = jnp.dot(p_ref[...], w_ref[...], preferred_element_type=jnp.float32)
        o_ref[...] = (y + b_ref[...]).astype(o_ref.dtype)


def fused_multi_level_matmul(patches, weights, biases):
    """y_i = patches_i @ weights_i + biases_i for every level, in ONE pallas_call.

    patches[i]: (M_i, K_i)  bf16
    weights[i]: (K_i, N_i)  bf16  (stage-proj + 1x1 conv fused, block-diagonal)
    biases[i] : (1,  N_i)   f32
    returns   : tuple of (M_i, N_i) f32
    """
    in_specs, args, out_shapes, out_specs = [], [], [], []
    vmem_bytes = 0
    for p, w, b in zip(patches, weights, biases):
        M, K = p.shape
        K2, N = w.shape
        assert K == K2, (K, K2)
        in_specs += [
            pl.BlockSpec((M, K), lambda i: (0, 0)),
            pl.BlockSpec((K, N), lambda i: (0, 0)),
            pl.BlockSpec((1, N), lambda i: (0, 0)),
        ]
        args += [p, w, b]
        out_shapes.append(jax.ShapeDtypeStruct((M, N), jnp.float32))
        out_specs.append(pl.BlockSpec((M, N), lambda i: (0, 0)))
        vmem_bytes += (p.size * p.dtype.itemsize + w.size * w.dtype.itemsize
                       + b.size * b.dtype.itemsize + M * N * 4)

    vmem_limit = 4 * 1024 * 1024
    # Full-block, single-step design: only valid while everything (with
    # double-buffering + tile padding headroom) fits comfortably in VMEM.
    assert 4 * vmem_bytes < vmem_limit, (
        "fused single-call path is for small shapes; tile over M for large inputs")

    return pl.pallas_call(
        _multi_level_kernel,
        out_shape=tuple(out_shapes),
        grid=(1,),
        in_specs=in_specs,
        out_specs=tuple(out_specs),
        compiler_params=pltpu.CompilerParams(
            # grid=(1,): nothing to shard across TensorCores, so "parallel"
            # would be vacuous here.
            dimension_semantics=("arbitrary",),
            vmem_limit_bytes=vmem_limit,
        ),
    )(*args)


# --------------------------------------------------------------------------
# Module port
# --------------------------------------------------------------------------
class LongSpikeStreamEncoderConvPallas:
    """JAX/Pallas port of LongSpikeStreamEncoderConv.forward (small config)."""

    def __init__(self, key, patch_size=(8, 2, 2), in_chans=32, embed_dim=32,
                 depths=(2, 2)):
        self.patch_size = patch_size
        self.in_chans = in_chans
        self.embed_dim = embed_dim
        self.num_encoders = len(depths)
        self.num_blocks = in_chans // patch_size[0]
        self.out_channels = [embed_dim * 2 ** i for i in range(self.num_encoders)]

        keys = jax.random.split(key, 3 * self.num_encoders)
        self.conv_w = []      # per level: (T, C_i, C_i // T)   unfused, reference path
        self.conv_b = []      # per level: (T, 1, C_i // T)
        self.stage_proj = []  # per level: (pdim, C_i)          synthesized backbone proj
        k_idx = 0
        for i in range(self.num_encoders):
            Ci = self.out_channels[i]
            Cout = Ci // self.num_blocks
            w = 0.02 * jax.random.normal(
                keys[k_idx], (self.num_blocks, Ci, Cout), dtype=jnp.float32)
            b = 0.01 * jax.random.normal(
                keys[k_idx + 1], (self.num_blocks, 1, Cout), dtype=jnp.float32)
            k_idx += 2
            self.conv_w.append(w)
            self.conv_b.append(b)
        for i in range(self.num_encoders):
            sh = patch_size[1] * 2 ** i
            sw = patch_size[2] * 2 ** i
            pdim = patch_size[0] * sh * sw
            proj = (1.0 / pdim) * jax.random.normal(
                keys[k_idx], (pdim, self.out_channels[i]), dtype=jnp.float32)
            k_idx += 1
            self.stage_proj.append(proj)

        # ---- Offline fusion: stage projection + per-block 1x1 conv ---------
        # (patches @ proj) @ conv_w[k] == patches @ (proj @ conv_w[k]); stack
        # the T fused weights block-diagonally so each level is ONE matmul.
        # NOTE (v5e, large shapes): the block-diagonal K is 75% zeros; once
        # MXU-bound, replace with an unrolled in-kernel loop over T using the
        # dense (pdim, Cout) blocks and disjoint N-slices of the output.
        self.w_big = []   # per level: (T*pdim, T*Cout) f32 master
        self.b_big = []   # per level: (1, T*Cout)      f32
        T = self.num_blocks
        for i in range(self.num_encoders):
            pdim = self.stage_proj[i].shape[0]
            Cout = self.out_channels[i] // T
            w_fused = jnp.einsum("pc,tco->tpo", self.stage_proj[i],
                                 self.conv_w[i])            # (T, pdim, Cout)
            w_big = jnp.zeros((T * pdim, T * Cout), dtype=jnp.float32)
            for k in range(T):
                w_big = w_big.at[k * pdim:(k + 1) * pdim,
                                 k * Cout:(k + 1) * Cout].set(w_fused[k])
            self.w_big.append(w_big)
            self.b_big.append(self.conv_b[i].reshape(1, T * Cout))
        # bf16 operand copies for the MXU (f32 accumulation stays in-kernel).
        self.w_big_bf16 = [w.astype(jnp.bfloat16) for w in self.w_big]

        # Whole forward (patch relayout + single pallas_call + NCHW relayout)
        # under one jit -> one dispatched executable.
        self._forward_jit = jax.jit(self._forward)

    # ---------------- synthesized backbone (reference path only) ------------
    def _swin3d_features(self, x):
        # TODO(synk): SwinTransformer3D definition is not provided with the module;
        # features are synthesized deterministically via a fixed linear patch
        # projection per stage, shaped like the real backbone outputs (B, C_i, T, H_i, W_i).
        B, C, H, W = x.shape
        T = self.num_blocks
        pt = self.patch_size[0]
        feats = []
        for i, Ci in enumerate(self.out_channels):
            sh = self.patch_size[1] * 2 ** i
            sw = self.patch_size[2] * 2 ** i
            Hi, Wi = H // sh, W // sw
            patches = x.reshape(B, T, pt, Hi, sh, Wi, sw)
            patches = jnp.transpose(patches, (0, 1, 3, 5, 2, 4, 6))
            patches = patches.reshape(B, T, Hi, Wi, pt * sh * sw)
            f = patches @ self.stage_proj[i]          # (B, T, Hi, Wi, Ci)
            f = jnp.transpose(f, (0, 4, 1, 2, 3))     # (B, Ci, T, Hi, Wi)
            feats.append(f)
        return feats

    # ---------------- fused Pallas forward ----------------------------------
    def _forward(self, x):
        B, C, H, W = x.shape
        T = self.num_blocks
        pt = self.patch_size[0]
        patches = []
        spatial = []
        for i in range(self.num_encoders):
            sh = self.patch_size[1] * 2 ** i
            sw = self.patch_size[2] * 2 ** i
            Hi, Wi = H // sh, W // sw
            pdim = pt * sh * sw
            # Patch-layout move (fused by XLA under the surrounding jit):
            # (B,C,H,W) -> (B,Hi,Wi,T,pt,sh,sw) -> (M, T*pdim), M = B*Hi*Wi.
            p = x.reshape(B, T, pt, Hi, sh, Wi, sw)
            p = jnp.transpose(p, (0, 3, 5, 1, 2, 4, 6))
            p = p.reshape(B * Hi * Wi, T * pdim).astype(jnp.bfloat16)
            patches.append(p)
            spatial.append((Hi, Wi))

        # ONE pallas_call for every level.
        ys = fused_multi_level_matmul(patches, self.w_big_bf16, self.b_big)

        outs = []
        for i, y in enumerate(ys):
            Hi, Wi = spatial[i]
            # (M, T*Cout) -> NCHW, channels block-major (t, cout) like torch.cat(dim=1).
            y = y.reshape(B, Hi, Wi, self.out_channels[i])
            y = jnp.transpose(y, (0, 3, 1, 2)).astype(x.dtype)   # (B, T*Cout, Hi, Wi)
            outs.append(y)
        return outs

    def __call__(self, x):
        return self._forward_jit(x)

    # ---------------- pure-JAX reference mirroring the PyTorch forward ------
    def reference(self, x):
        feats = self._swin3d_features(x)
        outs = []
        for i, f in enumerate(feats):
            chunks = []
            for k in range(self.num_blocks):
                fk = f[:, :, k, :, :]                              # (B, Ci, Hi, Wi)
                wk = self.conv_w[i][k]                             # (Ci, Cout)
                bk = self.conv_b[i][k][0]                          # (Cout,)
                ok = jnp.einsum("bchw,co->bohw", fk, wk) + bk[None, :, None, None]
                chunks.append(ok)
            outs.append(jnp.concatenate(chunks, axis=1))
        return outs


if __name__ == "__main__":
    key = jax.random.PRNGKey(0)
    k_param, k_x = jax.random.split(key)

    # Small config consistent with the module: in_chans // patch_size[0] = 4
    # temporal blocks, two encoder stages, 2x spatial downsample per stage.
    model = LongSpikeStreamEncoderConvPallas(
        k_param, patch_size=(8, 2, 2), in_chans=32, embed_dim=32, depths=(2, 2))

    x = jax.random.normal(k_x, (2, 32, 16, 16), dtype=jnp.float32)  # (B, C, H, W)

    outs = model(x)
    outs = [jax.block_until_ready(o) for o in outs]

    refs = model.reference(x)
    for o, r in zip(outs, refs):
        assert o.shape == r.shape, (o.shape, r.shape)
        # bf16 MXU operands (f32 accumulation): relaxed tolerance vs f32 reference.
        err = float(jnp.max(jnp.abs(o - r)))
        assert jnp.allclose(o, r, atol=2e-2, rtol=2e-2), err

    print("KERNEL_OK")
</pallas_src>

<mosaic_0001>
module attributes {stable_mosaic.version = 11 : i64} {
  func.func @_multi_level_kernel(%arg0: i32, %arg1: memref<128x128xbf16, #tpu.memory_space<vmem>>, %arg2: memref<128x32xbf16, #tpu.memory_space<vmem>>, %arg3: memref<1x32xf32, #tpu.memory_space<vmem>>, %arg4: memref<32x512xbf16, #tpu.memory_space<vmem>>, %arg5: memref<512x64xbf16, #tpu.memory_space<vmem>>, %arg6: memref<1x64xf32, #tpu.memory_space<vmem>>, %arg7: memref<128x32xf32, #tpu.memory_space<vmem>>, %arg8: memref<32x64xf32, #tpu.memory_space<vmem>>) attributes {dimension_semantics = [#tpu.dimension_semantics<arbitrary>], iteration_bounds = array<i64: 1>, scalar_prefetch = 0 : i64, scratch_operands = 0 : i64, tpu.core_type = #tpu.core_type<tc>, window_params = [{pipeline_mode = #tpu.pipeline_mode<synchronous>, transform_indices = @transform_0, window_bounds = array<i64: 128, 128>}, {pipeline_mode = #tpu.pipeline_mode<synchronous>, transform_indices = @transform_1, window_bounds = array<i64: 128, 32>}, {pipeline_mode = #tpu.pipeline_mode<synchronous>, transform_indices = @transform_2, window_bounds = array<i64: 1, 32>}, {pipeline_mode = #tpu.pipeline_mode<synchronous>, transform_indices = @transform_3, window_bounds = array<i64: 32, 512>}, {pipeline_mode = #tpu.pipeline_mode<synchronous>, transform_indices = @transform_4, window_bounds = array<i64: 512, 64>}, {pipeline_mode = #tpu.pipeline_mode<synchronous>, transform_indices = @transform_5, window_bounds = array<i64: 1, 64>}, {pipeline_mode = #tpu.pipeline_mode<synchronous>, transform_indices = @transform_6, window_bounds = array<i64: 128, 32>}, {pipeline_mode = #tpu.pipeline_mode<synchronous>, transform_indices = @transform_7, window_bounds = array<i64: 32, 64>}]} {
    %c0 = arith.constant 0 : index
    %c0_0 = arith.constant 0 : index
    %0 = vector.load %arg1[%c0, %c0_0] : memref<128x128xbf16, #tpu.memory_space<vmem>>, vector<128x128xbf16>
    %c0_1 = arith.constant 0 : index
    %c0_2 = arith.constant 0 : index
    %1 = vector.load %arg2[%c0_1, %c0_2] : memref<128x32xbf16, #tpu.memory_space<vmem>>, vector<128x32xbf16>
    %cst = arith.constant dense<0.000000e+00> : vector<128x32xf32>
    %2 = tpu.matmul %0, %1, %cst {dimension_numbers = #tpu.dot_dimension_numbers<[1], [0], [0], [1], [0, 0, 1, 1], [], []>} : vector<128x128xbf16>, vector<128x32xbf16>, vector<128x32xf32> -> vector<128x32xf32>
    %c0_3 = arith.constant 0 : index
    %c0_4 = arith.constant 0 : index
    %3 = vector.load %arg3[%c0_3, %c0_4] : memref<1x32xf32, #tpu.memory_space<vmem>>, vector<1x32xf32>
    %4 = vector.broadcast %3 : vector<1x32xf32> to vector<128x32xf32>
    %5 = arith.addf %2, %4 : vector<128x32xf32>
    %c0_5 = arith.constant 0 : index
    %c0_6 = arith.constant 0 : index
    %6 = vector.load %arg7[%c0_5, %c0_6] : memref<128x32xf32, #tpu.memory_space<vmem>>, vector<128x32xf32>
    tpu.vector_store %arg7[%c0_5, %c0_6], %5 {strides = array<i32>} : memref<128x32xf32, #tpu.memory_space<vmem>>, vector<128x32xf32>,
    %c0_7 = arith.constant 0 : index
    %c0_8 = arith.constant 0 : index
    %7 = vector.load %arg4[%c0_7, %c0_8] : memref<32x512xbf16, #tpu.memory_space<vmem>>, vector<32x512xbf16>
    %c0_9 = arith.constant 0 : index
    %c0_10 = arith.constant 0 : index
    %8 = vector.load %arg5[%c0_9, %c0_10] : memref<512x64xbf16, #tpu.memory_space<vmem>>, vector<512x64xbf16>
    %cst_11 = arith.constant dense<0.000000e+00> : vector<32x64xf32>
    %9 = tpu.matmul %7, %8, %cst_11 {dimension_numbers = #tpu.dot_dimension_numbers<[1], [0], [0], [1], [0, 0, 1, 1], [], []>} : vector<32x512xbf16>, vector<512x64xbf16>, vector<32x64xf32> -> vector<32x64xf32>
    %c0_12 = arith.constant 0 : index
    %c0_13 = arith.constant 0 : index
    %10 = vector.load %arg6[%c0_12, %c0_13] : memref<1x64xf32, #tpu.memory_space<vmem>>, vector<1x64xf32>
    %11 = vector.broadcast %10 : vector<1x64xf32> to vector<32x64xf32>
    %12 = arith.addf %9, %11 : vector<32x64xf32>
    %c0_14 = arith.constant 0 : index
    %c0_15 = arith.constant 0 : index
    %13 = vector.load %arg8[%c0_14, %c0_15] : memref<32x64xf32, #tpu.memory_space<vmem>>, vector<32x64xf32>
    tpu.vector_store %arg8[%c0_14, %c0_15], %12 {strides = array<i32>} : memref<32x64xf32, #tpu.memory_space<vmem>>, vector<32x64xf32>,
    return
  }
  func.func @transform_0(%arg0: i32) -> (i32, i32) {
    %c0_i32 = arith.constant 0 : i32
    %c0_i32_0 = arith.constant 0 : i32
    %c0_i32_1 = arith.constant 0 : i32
    return %c0_i32, %c0_i32_0 : i32, i32
  }
  func.func @transform_1(%arg0: i32) -> (i32, i32) {
    %c0_i32 = arith.constant 0 : i32
    %c0_i32_0 = arith.constant 0 : i32
    %c0_i32_1 = arith.constant 0 : i32
    return %c0_i32, %c0_i32_0 : i32, i32
  }
  func.func @transform_2(%arg0: i32) -> (i32, i32) {
    %c0_i32 = arith.constant 0 : i32
    %c0_i32_0 = arith.constant 0 : i32
    %c0_i32_1 = arith.constant 0 : i32
    return %c0_i32, %c0_i32_0 : i32, i32
  }
  func.func @transform_3(%arg0: i32) -> (i32, i32) {
    %c0_i32 = arith.constant 0 : i32
    %c0_i32_0 = arith.constant 0 : i32
    %c0_i32_1 = arith.constant 0 : i32
    return %c0_i32, %c0_i32_0 : i32, i32
  }
  func.func @transform_4(%arg0: i32) -> (i32, i32) {
    %c0_i32 = arith.constant 0 : i32
    %c0_i32_0 = arith.constant 0 : i32
    %c0_i32_1 = arith.constant 0 : i32
    return %c0_i32, %c0_i32_0 : i32, i32
  }
  func.func @transform_5(%arg0: i32) -> (i32, i32) {
    %c0_i32 = arith.constant 0 : i32
    %c0_i32_0 = arith.constant 0 : i32
    %c0_i32_1 = arith.constant 0 : i32
    return %c0_i32, %c0_i32_0 : i32, i32
  }
  func.func @transform_6(%arg0: i32) -> (i32, i32) {
    %c0_i32 = arith.constant 0 : i32
    %c0_i32_0 = arith.constant 0 : i32
    %c0_i32_1 = arith.constant 0 : i32
    return %c0_i32, %c0_i32_0 : i32, i32
  }
  func.func @transform_7(%arg0: i32) -> (i32, i32) {
    %c0_i32 = arith.constant 0 : i32
    %c0_i32_0 = arith.constant 0 : i32
    %c0_i32_1 = arith.constant 0 : i32
    return %c0_i32, %c0_i32_0 : i32, i32
  }
}

</mosaic_0001>

<llo_original>
// kernel: _forward.1
$region0: #{_forward.1}
  #allocation0 [shape = 'u32[]', space=smem, size = 0x4, offset = 0x4, fixed_abs, tag = 'smem constant byte address 0x4 - core index']
  #allocation1 [shape = 'u32[144,128]{1,0:T(1,128)}', space=vmem, size = 0x12000, scoped, tag = 'internal scratch']
  %s0 = inlined_call_operand.vmem [shape: bf16[128,128], index: 0, kind: input, shape index: {}]
  %s1 = inlined_call_operand.vmem [shape: bf16[128,32], index: 1, kind: input, shape index: {}]
  %s2 = inlined_call_operand.vmem [shape: f32[1,32], index: 2, kind: input, shape index: {}]
  %s3 = inlined_call_operand.vmem [shape: bf16[32,512], index: 3, kind: input, shape index: {}]
  %s4 = inlined_call_operand.vmem [shape: bf16[512,64], index: 4, kind: input, shape index: {}]
  %s5 = inlined_call_operand.vmem [shape: f32[1,64], index: 5, kind: input, shape index: {}]
  %s6 = inlined_call_operand.hbm [shape: f32[128,32], index: 6, kind: output, shape index: {0}]
  %s7 = inlined_call_operand.hbm [shape: f32[32,64], index: 7, kind: output, shape index: {1}]
  %8 = xla_tuple %s6, %s7
  %s9 = sld [smem:[#allocation0]]
  $region42: #{_forward.1} parent=0
    _
  %s11 = ssub.s32 1, %s9
  %s12 = scalar_select 0, %s11, %s9
  $region1: #{_forward.1} parent=0
    #allocation2 [shape = 'u8[65536]{0}', space=vmem, size = 0x10000, scoped, tag = 'output window, operand 0, single buffered']
    #allocation3 [shape = 's32[1]{0}', space=sflag, size = 0x4, scoped, tag = 'scoped memory for _forward.1']
    #allocation4 [shape = 'u8[16384]{0}', space=vmem, size = 0x4000, scoped, tag = 'output window, operand 1, single buffered']
    #allocation5 [shape = 's32[1]{0}', space=sflag, size = 0x4, scoped, tag = 'scoped memory for _forward.1']
    %13 = vsyncpa [#allocation3], 0
    %14 = vsyncpa [#allocation5], 0
    // Predicated region
    $region2: #{_forward.1} parent=1 // pred_check
      _
    $region3: #{_forward.1} parent=1 // pred_check_branch
      %16 = sbr.rel (0) target = $region5
    $region4: #{_forward.1} parent=1 // pred_region
      _
    $region5: #{_forward.1} parent=1 // pred_fallthru
      _
    // Predicated region
    $region6: #{_forward.1} parent=1 // pred_check
      _
    $region7: #{_forward.1} parent=1 // pred_check_branch
      %18 = sbr.rel (0) target = $region9
    $region8: #{_forward.1} parent=1 // pred_region
      _
    $region9: #{_forward.1} parent=1 // pred_fallthru
      _
    // Predicated region
    $region10: #{_forward.1} parent=1 // pred_check
      _
    $region11: #{_forward.1} parent=1 // pred_check_branch
      %20 = sbr.rel (0) target = $region13
    $region12: #{_forward.1} parent=1 // pred_region
      _
    $region13: #{_forward.1} parent=1 // pred_fallthru
      _
    // Predicated region
    $region14: #{_forward.1} parent=1 // pred_check
      _
    $region15: #{_forward.1} parent=1 // pred_check_branch
      %22 = sbr.rel (0) target = $region17
    $region16: #{_forward.1} parent=1 // pred_region
      _
    $region17: #{_forward.1} parent=1 // pred_fallthru
      _
    // Predicated region
    $region18: #{_forward.1} parent=1 // pred_check
      _
    $region19: #{_forward.1} parent=1 // pred_check_branch
      %24 = sbr.rel (0) target = $region21
    $region20: #{_forward.1} parent=1 // pred_region
      _
    $region21: #{_forward.1} parent=1 // pred_fallthru
      _
    // Predicated region
    $region22: #{_forward.1} parent=1 // pred_check
      _
    $region23: #{_forward.1} parent=1 // pred_check_branch
      %26 = sbr.rel (0) target = $region25
    $region24: #{_forward.1} parent=1 // pred_region
      _
    $region25: #{_forward.1} parent=1 // pred_fallthru
      _
    %v28 = vld [vmem:[%s0] sm:$0xf]
    %v29 = vld [vmem:[%s0 + $0x4] sm:$0xf]
    %v30 = vld [vmem:[%s0 + $0x8] sm:$0xf]
    %v31 = vld [vmem:[%s0 + $0xc] sm:$0xf]
    %v32 = vld [vmem:[%s0 + $0x10] sm:$0xf]
    %v33 = vld [vmem:[%s0 + $0x14] sm:$0xf]
    %v34 = vld [vmem:[%s0 + $0x18] sm:$0xf]
    %v35 = vld [vmem:[%s0 + $0x1c] sm:$0xf]
    %v36 = vld [vmem:[%s0 + $0x20] sm:$0xf]
    %v37 = vld [vmem:[%s0 + $0x24] sm:$0xf]
    %v38 = vld [vmem:[%s0 + $0x28] sm:$0xf]
    %v39 = vld [vmem:[%s0 + $0x2c] sm:$0xf]
    %v40 = vld [vmem:[%s0 + $0x30] sm:$0xf]
    %v41 = vld [vmem:[%s0 + $0x34] sm:$0xf]
    %v42 = vld [vmem:[%s0 + $0x38] sm:$0xf]
    %v43 = vld [vmem:[%s0 + $0x3c] sm:$0xf]
    %v44 = vld [vmem:[%s1] sm:$0xf]
    %v45 = vld [vmem:[%s1 + $0x4] sm:$0xf]
    %v46 = vld [vmem:[%s1 + $0x8] sm:$0xf]
    %v47 = vld [vmem:[%s1 + $0xc] sm:$0xf]
    %v48 = vld [vmem:[%s1 + $0x10] sm:$0xf]
    %v49 = vld [vmem:[%s1 + $0x14] sm:$0xf]
    %v50 = vld [vmem:[%s1 + $0x18] sm:$0xf]
    %v51 = vld [vmem:[%s1 + $0x1c] sm:$0xf]
    %v52 = vld [vmem:[%s1 + $0x20] sm:$0xf]
    %v53 = vld [vmem:[%s1 + $0x24] sm:$0xf]
    %v54 = vld [vmem:[%s1 + $0x28] sm:$0xf]
    %v55 = vld [vmem:[%s1 + $0x2c] sm:$0xf]
    %v56 = vld [vmem:[%s1 + $0x30] sm:$0xf]
    %v57 = vld [vmem:[%s1 + $0x34] sm:$0xf]
    %v58 = vld [vmem:[%s1 + $0x38] sm:$0xf]
    %v59 = vld [vmem:[%s1 + $0x3c] sm:$0xf]
    %v60 = vld [vmem:[%s2] sm:$0x1]
    %v62 = vlaneseq
    %v63 = vshrl.u32 %v62, 7
    %v64 = vsub.s32 0, %v63
    %v65 = vrot.slane %v60, %v64
    %v83 = vunpack.c.l.b16 %v28
    %v84 = vunpack.c.l.b16 %v29
    %v85 = vunpack.c.l.b16 %v30
    %v86 = vunpack.c.l.b16 %v31
    %v87 = vunpack.c.l.b16 %v32
    %v88 = vunpack.c.l.b16 %v33
    %v89 = vunpack.c.l.b16 %v34
    %v90 = vunpack.c.l.b16 %v35
    %v91 = vunpack.c.l.b16 %v36
    %v92 = vunpack.c.l.b16 %v37
    %v93 = vunpack.c.l.b16 %v38
    %v94 = vunpack.c.l.b16 %v39
    %v95 = vunpack.c.l.b16 %v40
    %v96 = vunpack.c.l.b16 %v41
    %v97 = vunpack.c.l.b16 %v42
    %v98 = vunpack.c.l.b16 %v43
    %v99 = vpack.c.b16 %v84, %v83
    %v100 = vpack.c.b16 %v86, %v85
    %v101 = vpack.c.b16 %v88, %v87
    %v102 = vpack.c.b16 %v90, %v89
    %v103 = vpack.c.b16 %v92, %v91
    %v104 = vpack.c.b16 %v94, %v93
    %v105 = vpack.c.b16 %v96, %v95
    %v106 = vpack.c.b16 %v98, %v97
    %v131 = vunpack.c.l.b16 %v44
    %v132 = vunpack.c.l.b16 %v45
    %v133 = vunpack.c.l.b16 %v46
    %v134 = vunpack.c.l.b16 %v47
    %v135 = vunpack.c.l.b16 %v48
    %v136 = vunpack.c.l.b16 %v49
    %v137 = vunpack.c.l.b16 %v50
    %v138 = vunpack.c.l.b16 %v51
    %v139 = vunpack.c.l.b16 %v52
    %v140 = vunpack.c.l.b16 %v53
    %v141 = vunpack.c.l.b16 %v54
    %v142 = vunpack.c.l.b16 %v55
    %v143 = vunpack.c.l.b16 %v56
    %v144 = vunpack.c.l.b16 %v57
    %v145 = vunpack.c.l.b16 %v58
    %v146 = vunpack.c.l.b16 %v59
    %v147 = vpack.c.b16 %v132, %v131
    %v148 = vpack.c.b16 %v134, %v133
    %v149 = vpack.c.b16 %v136, %v135
    %v150 = vpack.c.b16 %v138, %v137
    %v151 = vpack.c.b16 %v140, %v139
    %v152 = vpack.c.b16 %v142, %v141
    %v153 = vpack.c.b16 %v144, %v143
    %v154 = vpack.c.b16 %v146, %v145
    %163 = vmatprep.subr.bf16.mxu0 0
    %164 = vmatpush1.bf16.msra.mxu0 %v147
    %165 = vmatprep.subr.bf16.mxu0 0
    %166 = vmatpush1.bf16.msra.mxu0 %v148
    %167 = vmatprep.subr.bf16.mxu0 0
    %168 = vmatpush1.bf16.msra.mxu0 %v149
    %169 = vmatprep.subr.bf16.mxu0 0
    %170 = vmatpush1.bf16.msra.mxu0 %v150
    %171 = vmatprep.subr.bf16.mxu0 0
    %172 = vmatpush1.bf16.msra.mxu0 %v151
    %173 = vmatprep.subr.bf16.mxu0 0
    %174 = vmatpush1.bf16.msra.mxu0 %v152
    %175 = vmatprep.subr.bf16.mxu0 0
    %176 = vmatpush1.bf16.msra.mxu0 %v153
    %177 = vmatprep.subr.bf16.mxu0 0
    %178 = vmatpush1.bf16.msra.mxu0 %v154
    %179 = vmatprep.subr.bf16.mxu0 0
    %180 = vmatpush1.bf16.msra.mxu0 0
    %181 = vmatprep.subr.bf16.mxu0 0
    %182 = vmatpush1.bf16.msra.mxu0 0
    %183 = vmatprep.subr.bf16.mxu0 0
    %184 = vmatpush1.bf16.msra.mxu0 0
    %185 = vmatprep.subr.bf16.mxu0 0
    %186 = vmatpush1.bf16.msra.mxu0 0
    %187 = vmatprep.subr.bf16.mxu0 0
    %188 = vmatpush1.bf16.msra.mxu0 0
    %189 = vmatprep.subr.bf16.mxu0 0
    %190 = vmatpush1.bf16.msra.mxu0 0
    %191 = vmatprep.subr.bf16.mxu0 0
    %192 = vmatpush1.bf16.msra.mxu0 0
    %193 = vmatprep.subr.bf16.mxu0 0
    %194 = vmatpush1.bf16.msra.mxu0 0
    %195 = vmatprep.mubr.bf16.mxu0 0
    %196 = vmatmul.mubr.bf16.gmra.mrb[0].mxu0 %v99
    %v197 = vpop.f32.mrb[0].mxu0
    %v198 = vadd.f32 %v65, %v197
    %v199 = vpop.f32.mrb[0].mxu0
    %v200 = vpop.f32.mrb[0].mxu0
    %v201 = vadd.f32 %v65, %v200
    %v202 = vpop.f32.mrb[0].mxu0
    %203 = vmatprep.mubr.bf16.mxu0 0
    %204 = vmatmul.mubr.bf16.gmra.mrb[0].mxu0 %v100
    %v205 = vpop.f32.mrb[0].mxu0
    %v206 = vadd.f32 %v65, %v205
    %v207 = vpop.f32.mrb[0].mxu0
    %v208 = vpop.f32.mrb[0].mxu0
    %v209 = vadd.f32 %v65, %v208
    %v210 = vpop.f32.mrb[0].mxu0
    %211 = vmatprep.mubr.bf16.mxu0 0
    %212 = vmatmul.mubr.bf16.gmra.mrb[0].mxu0 %v101
    %v213 = vpop.f32.mrb[0].mxu0
    %v214 = vadd.f32 %v65, %v213
    %v215 = vpop.f32.mrb[0].mxu0
    %v216 = vpop.f32.mrb[0].mxu0
    %v217 = vadd.f32 %v65, %v216
    %v218 = vpop.f32.mrb[0].mxu0
    %219 = vmatprep.mubr.bf16.mxu0 0
    %220 = vmatmul.mubr.bf16.gmra.mrb[0].mxu0 %v102
    %v221 = vpop.f32.mrb[0].mxu0
    %v222 = vadd.f32 %v65, %v221
    %v223 = vpop.f32.mrb[0].mxu0
    %v224 = vpop.f32.mrb[0].mxu0
    %v225 = vadd.f32 %v65, %v224
    %v226 = vpop.f32.mrb[0].mxu0
    %227 = vmatprep.mubr.bf16.mxu0 0
    %228 = vmatmul.mubr.bf16.gmra.mrb[0].mxu0 %v103
    %v229 = vpop.f32.mrb[0].mxu0
    %v230 = vadd.f32 %v65, %v229
    %v231 = vpop.f32.mrb[0].mxu0
    %v232 = vpop.f32.mrb[0].mxu0
    %v233 = vadd.f32 %v65, %v232
    %v234 = vpop.f32.mrb[0].mxu0
    %235 = vmatprep.mubr.bf16.mxu0 0
    %236 = vmatmul.mubr.bf16.gmra.mrb[0].mxu0 %v104
    %v237 = vpop.f32.mrb[0].mxu0
    %v238 = vadd.f32 %v65, %v237
    %v239 = vpop.f32.mrb[0].mxu0
    %v240 = vpop.f32.mrb[0].mxu0
    %v241 = vadd.f32 %v65, %v240
    %v242 = vpop.f32.mrb[0].mxu0
    %243 = vmatprep.mubr.bf16.mxu0 0
    %244 = vmatmul.mubr.bf16.gmra.mrb[0].mxu0 %v105
    %v245 = vpop.f32.mrb[0].mxu0
    %v246 = vadd.f32 %v65, %v245
    %v247 = vpop.f32.mrb[0].mxu0
    %v248 = vpop.f32.mrb[0].mxu0
    %v249 = vadd.f32 %v65, %v248
    %v250 = vpop.f32.mrb[0].mxu0
    %251 = vmatprep.mubr.bf16.mxu0 0
    %252 = vmatmul.mubr.bf16.gmra.mrb[0].mxu0 %v106
    %v253 = vpop.f32.mrb[0].mxu0
    %v254 = vadd.f32 %v65, %v253
    %v255 = vpop.f32.mrb[0].mxu0
    %v256 = vpop.f32.mrb[0].mxu0
    %v257 = vadd.f32 %v65, %v256
    %v258 = vpop.f32.mrb[0].mxu0
    %259 = vdwg.mxu0
    %vm260 = vcmask 261120
    %261 = vst.msk [vmem:[#allocation2] sm:$0xff] %vm260, %v198
    %262 = vst.msk [vmem:[#allocation2 + $0x8] sm:$0xff] %vm260, %v201
    %263 = vst.msk [vmem:[#allocation2 + $0x10] sm:$0xff] %vm260, %v206
    %264 = vst.msk [vmem:[#allocation2 + $0x18] sm:$0xff] %vm260, %v209
    %265 = vst.msk [vmem:[#allocation2 + $0x20] sm:$0xff] %vm260, %v214
    %266 = vst.msk [vmem:[#allocation2 + $0x28] sm:$0xff] %vm260, %v217
    %267 = vst.msk [vmem:[#allocation2 + $0x30] sm:$0xff] %vm260, %v222
    %268 = vst.msk [vmem:[#allocation2 + $0x38] sm:$0xff] %vm260, %v225
    %269 = vst.msk [vmem:[#allocation2 + $0x40] sm:$0xff] %vm260, %v230
    %270 = vst.msk [vmem:[#allocation2 + $0x48] sm:$0xff] %vm260, %v233
    %271 = vst.msk [vmem:[#allocation2 + $0x50] sm:$0xff] %vm260, %v238
    %272 = vst.msk [vmem:[#allocation2 + $0x58] sm:$0xff] %vm260, %v241
    %273 = vst.msk [vmem:[#allocation2 + $0x60] sm:$0xff] %vm260, %v246
    %274 = vst.msk [vmem:[#allocation2 + $0x68] sm:$0xff] %vm260, %v249
    %275 = vst.msk [vmem:[#allocation2 + $0x70] sm:$0xff] %vm260, %v254
    %276 = vst.msk [vmem:[#allocation2 + $0x78] sm:$0xff] %vm260, %v257
    %v277 = vld [vmem:[%s3] sm:$0xff]
    %v278 = vld [vmem:[%s3 + $0x8] sm:$0xff]
    %v279 = vld [vmem:[%s3 + $0x10] sm:$0xff]
    %v280 = vld [vmem:[%s3 + $0x18] sm:$0xff]
    %v281 = vld [vmem:[%s3 + $0x20] sm:$0xff]
    %v282 = vld [vmem:[%s3 + $0x28] sm:$0xff]
    %v283 = vld [vmem:[%s3 + $0x30] sm:$0xff]
    %v284 = vld [vmem:[%s3 + $0x38] sm:$0xff]
    %v285 = vld [vmem:[%s4] sm:$0xf]
    %v286 = vld [vmem:[%s4 + $0x4] sm:$0xf]
    %v287 = vld [vmem:[%s4 + $0x8] sm:$0xf]
    %v288 = vld [vmem:[%s4 + $0xc] sm:$0xf]
    %v289 = vld [vmem:[%s4 + $0x10] sm:$0xf]
    %v290 = vld [vmem:[%s4 + $0x14] sm:$0xf]
    %v291 = vld [vmem:[%s4 + $0x18] sm:$0xf]
    %v292 = vld [vmem:[%s4 + $0x1c] sm:$0xf]
    %v293 = vld [vmem:[%s4 + $0x20] sm:$0xf]
    %v294 = vld [vmem:[%s4 + $0x24] sm:$0xf]
    %v295 = vld [vmem:[%s4 + $0x28] sm:$0xf]
    %v296 = vld [vmem:[%s4 + $0x2c] sm:$0xf]
    %v297 = vld [vmem:[%s4 + $0x30] sm:$0xf]
    %v298 = vld [vmem:[%s4 + $0x34] sm:$0xf]
    %v299 = vld [vmem:[%s4 + $0x38] sm:$0xf]
    %v300 = vld [vmem:[%s4 + $0x3c] sm:$0xf]
    %v301 = vld [vmem:[%s4 + $0x40] sm:$0xf]
    %v302 = vld [vmem:[%s4 + $0x44] sm:$0xf]
    %v303 = vld [vmem:[%s4 + $0x48] sm:$0xf]
    %v304 = vld [vmem:[%s4 + $0x4c] sm:$0xf]
    %v305 = vld [vmem:[%s4 + $0x50] sm:$0xf]
    %v306 = vld [vmem:[%s4 + $0x54] sm:$0xf]
    %v307 = vld [vmem:[%s4 + $0x58] sm:$0xf]
    %v308 = vld [vmem:[%s4 + $0x5c] sm:$0xf]
    %v309 = vld [vmem:[%s4 + $0x60] sm:$0xf]
    %v310 = vld [vmem:[%s4 + $0x64] sm:$0xf]
    %v311 = vld [vmem:[%s4 + $0x68] sm:$0xf]
    %v312 = vld [vmem:[%s4 + $0x6c] sm:$0xf]
    %v313 = vld [vmem:[%s4 + $0x70] sm:$0xf]
    %v314 = vld [vmem:[%s4 + $0x74] sm:$0xf]
    %v315 = vld [vmem:[%s4 + $0x78] sm:$0xf]
    %v316 = vld [vmem:[%s4 + $0x7c] sm:$0xf]
    %v317 = vld [vmem:[%s4 + $0x80] sm:$0xf]
    %v318 = vld [vmem:[%s4 + $0x84] sm:$0xf]
    %v319 = vld [vmem:[%s4 + $0x88] sm:$0xf]
    %v320 = vld [vmem:[%s4 + $0x8c] sm:$0xf]
    %v321 = vld [vmem:[%s4 + $0x90] sm:$0xf]
    %v322 = vld [vmem:[%s4 + $0x94] sm:$0xf]
    %v323 = vld [vmem:[%s4 + $0x98] sm:$0xf]
    %v324 = vld [vmem:[%s4 + $0x9c] sm:$0xf]
    %v325 = vld [vmem:[%s4 + $0xa0] sm:$0xf]
    %v326 = vld [vmem:[%s4 + $0xa4] sm:$0xf]
    %v327 = vld [vmem:[%s4 + $0xa8] sm:$0xf]
    %v328 = vld [vmem:[%s4 + $0xac] sm:$0xf]
    %v329 = vld [vmem:[%s4 + $0xb0] sm:$0xf]
    %v330 = vld [vmem:[%s4 + $0xb4] sm:$0xf]
    %v331 = vld [vmem:[%s4 + $0xb8] sm:$0xf]
    %v332 = vld [vmem:[%s4 + $0xbc] sm:$0xf]
    %v333 = vld [vmem:[%s4 + $0xc0] sm:$0xf]
    %v334 = vld [vmem:[%s4 + $0xc4] sm:$0xf]
    %v335 = vld [vmem:[%s4 + $0xc8] sm:$0xf]
    %v336 = vld [vmem:[%s4 + $0xcc] sm:$0xf]
    %v337 = vld [vmem:[%s4 + $0xd0] sm:$0xf]
    %v338 = vld [vmem:[%s4 + $0xd4] sm:$0xf]
    %v339 = vld [vmem:[%s4 + $0xd8] sm:$0xf]
    %v340 = vld [vmem:[%s4 + $0xdc] sm:$0xf]
    %v341 = vld [vmem:[%s4 + $0xe0] sm:$0xf]
    %v342 = vld [vmem:[%s4 + $0xe4] sm:$0xf]
    %v343 = vld [vmem:[%s4 + $0xe8] sm:$0xf]
    %v344 = vld [vmem:[%s4 + $0xec] sm:$0xf]
    %v345 = vld [vmem:[%s4 + $0xf0] sm:$0xf]
    %v346 = vld [vmem:[%s4 + $0xf4] sm:$0xf]
    %v347 = vld [vmem:[%s4 + $0xf8] sm:$0xf]
    %v348 = vld [vmem:[%s4 + $0xfc] sm:$0xf]
    %v349 = vld [vmem:[%s5] sm:$0x1]
    %v351 = vlaneseq
    %v352 = vshrl.u32 %v351, 7
    %v353 = vsub.s32 0, %v352
    %v354 = vrot.slane %v349, %v353
    %v364 = vunpack.c.l.b16 %v277
    %v365 = vunpack.c.h.b16 %v277
    %v366 = vunpack.c.l.b16 %v278
    %v367 = vunpack.c.h.b16 %v278
    %v368 = vunpack.c.l.b16 %v279
    %v369 = vunpack.c.h.b16 %v279
    %v370 = vunpack.c.l.b16 %v280
    %v371 = vunpack.c.h.b16 %v280
    %v372 = vunpack.c.l.b16 %v281
    %v373 = vunpack.c.h.b16 %v281
    %v374 = vunpack.c.l.b16 %v282
    %v375 = vunpack.c.h.b16 %v282
    %v376 = vunpack.c.l.b16 %v283
    %v377 = vunpack.c.h.b16 %v283
    %v378 = vunpack.c.l.b16 %v284
    %v379 = vunpack.c.h.b16 %v284
    %v380 = vpack.c.b16 %v368, %v364
    %v381 = vpack.c.b16 %v369, %v365
    %v382 = vpack.c.b16 %v370, %v366
    %v383 = vpack.c.b16 %v371, %v367
    %v384 = vpack.c.b16 %v376, %v372
    %v385 = vpack.c.b16 %v377, %v373
    %v386 = vpack.c.b16 %v378, %v374
    %v387 = vpack.c.b16 %v379, %v375
    %v460 = vunpack.c.l.b16 %v285
    %v461 = vunpack.c.l.b16 %v286
    %v462 = vunpack.c.l.b16 %v287
    %v463 = vunpack.c.l.b16 %v288
    %v464 = vunpack.c.l.b16 %v289
    %v465 = vunpack.c.l.b16 %v290
    %v466 = vunpack.c.l.b16 %v291
    %v467 = vunpack.c.l.b16 %v292
    %v468 = vunpack.c.l.b16 %v293
    %v469 = vunpack.c.l.b16 %v294
    %v470 = vunpack.c.l.b16 %v295
    %v471 = vunpack.c.l.b16 %v296
    %v472 = vunpack.c.l.b16 %v297
    %v473 = vunpack.c.l.b16 %v298
    %v474 = vunpack.c.l.b16 %v299
    %v475 = vunpack.c.l.b16 %v300
    %v476 = vunpack.c.l.b16 %v301
    %v477 = vunpack.c.l.b16 %v302
    %v478 = vunpack.c.l.b16 %v303
    %v479 = vunpack.c.l.b16 %v304
    %v480 = vunpack.c.l.b16 %v305
    %v481 = vunpack.c.l.b16 %v306
    %v482 = vunpack.c.l.b16 %v307
    %v483 = vunpack.c.l.b16 %v308
    %v484 = vunpack.c.l.b16 %v309
    %v485 = vunpack.c.l.b16 %v310
    %v486 = vunpack.c.l.b16 %v311
    %v487 = vunpack.c.l.b16 %v312
    %v488 = vunpack.c.l.b16 %v313
    %v489 = vunpack.c.l.b16 %v314
    %v490 = vunpack.c.l.b16 %v315
    %v491 = vunpack.c.l.b16 %v316
    %v492 = vunpack.c.l.b16 %v317
    %v493 = vunpack.c.l.b16 %v318
    %v494 = vunpack.c.l.b16 %v319
    %v495 = vunpack.c.l.b16 %v320
    %v496 = vunpack.c.l.b16 %v321
    %v497 = vunpack.c.l.b16 %v322
    %v498 = vunpack.c.l.b16 %v323
    %v499 = vunpack.c.l.b16 %v324
    %v500 = vunpack.c.l.b16 %v325
    %v501 = vunpack.c.l.b16 %v326
    %v502 = vunpack.c.l.b16 %v327
    %v503 = vunpack.c.l.b16 %v328
    %v504 = vunpack.c.l.b16 %v329
    %v505 = vunpack.c.l.b16 %v330
    %v506 = vunpack.c.l.b16 %v331
    %v507 = vunpack.c.l.b16 %v332
    %v508 = vunpack.c.l.b16 %v333
    %v509 = vunpack.c.l.b16 %v334
    %v510 = vunpack.c.l.b16 %v335
    %v511 = vunpack.c.l.b16 %v336
    %v512 = vunpack.c.l.b16 %v337
    %v513 = vunpack.c.l.b16 %v338
    %v514 = vunpack.c.l.b16 %v339
    %v515 = vunpack.c.l.b16 %v340
    %v516 = vunpack.c.l.b16 %v341
    %v517 = vunpack.c.l.b16 %v342
    %v518 = vunpack.c.l.b16 %v343
    %v519 = vunpack.c.l.b16 %v344
    %v520 = vunpack.c.l.b16 %v345
    %v521 = vunpack.c.l.b16 %v346
    %v522 = vunpack.c.l.b16 %v347
    %v523 = vunpack.c.l.b16 %v348
    %v524 = vpack.c.b16 %v461, %v460
    %v525 = vpack.c.b16 %v463, %v462
    %v526 = vpack.c.b16 %v465, %v464
    %v527 = vpack.c.b16 %v467, %v466
    %v528 = vpack.c.b16 %v469, %v468
    %v529 = vpack.c.b16 %v471, %v470
    %v530 = vpack.c.b16 %v473, %v472
    %v531 = vpack.c.b16 %v475, %v474
    %v532 = vpack.c.b16 %v477, %v476
    %v533 = vpack.c.b16 %v479, %v478
    %v534 = vpack.c.b16 %v481, %v480
    %v535 = vpack.c.b16 %v483, %v482
    %v536 = vpack.c.b16 %v485, %v484
    %v537 = vpack.c.b16 %v487, %v486
    %v538 = vpack.c.b16 %v489, %v488
    %v539 = vpack.c.b16 %v491, %v490
    %v540 = vpack.c.b16 %v493, %v492
    %v541 = vpack.c.b16 %v495, %v494
    %v542 = vpack.c.b16 %v497, %v496
    %v543 = vpack.c.b16 %v499, %v498
    %v544 = vpack.c.b16 %v501, %v500
    %v545 = vpack.c.b16 %v503, %v502
    %v546 = vpack.c.b16 %v505, %v504
    %v547 = vpack.c.b16 %v507, %v506
    %v548 = vpack.c.b16 %v509, %v508
    %v549 = vpack.c.b16 %v511, %v510
    %v550 = vpack.c.b16 %v513, %v512
    %v551 = vpack.c.b16 %v515, %v514
    %v552 = vpack.c.b16 %v517, %v516
    %v553 = vpack.c.b16 %v519, %v518
    %v554 = vpack.c.b16 %v521, %v520
    %v555 = vpack.c.b16 %v523, %v522
    %588 = vmatprep.subr.bf16.mxu0 0
    %589 = vmatpush1.bf16.msra.mxu0 %v524
    %590 = vmatprep.subr.bf16.mxu0 0
    %591 = vmatpush1.bf16.msra.mxu0 %v525
    %592 = vmatprep.subr.bf16.mxu0 0
    %593 = vmatpush1.bf16.msra.mxu0 %v526
    %594 = vmatprep.subr.bf16.mxu0 0
    %595 = vmatpush1.bf16.msra.mxu0 %v527
    %596 = vmatprep.subr.bf16.mxu0 0
    %597 = vmatpush1.bf16.msra.mxu0 %v528
    %598 = vmatprep.subr.bf16.mxu0 0
    %599 = vmatpush1.bf16.msra.mxu0 %v529
    %600 = vmatprep.subr.bf16.mxu0 0
    %601 = vmatpush1.bf16.msra.mxu0 %v530
    %602 = vmatprep.subr.bf16.mxu0 0
    %603 = vmatpush1.bf16.msra.mxu0 %v531
    %604 = vmatprep.subr.bf16.mxu0 0
    %605 = vmatpush1.bf16.msra.mxu0 %v532
    %606 = vmatprep.subr.bf16.mxu0 0
    %607 = vmatpush1.bf16.msra.mxu0 %v533
    %608 = vmatprep.subr.bf16.mxu0 0
    %609 = vmatpush1.bf16.msra.mxu0 %v534
    %610 = vmatprep.subr.bf16.mxu0 0
    %611 = vmatpush1.bf16.msra.mxu0 %v535
    %612 = vmatprep.subr.bf16.mxu0 0
    %613 = vmatpush1.bf16.msra.mxu0 %v536
    %614 = vmatprep.subr.bf16.mxu0 0
    %615 = vmatpush1.bf16.msra.mxu0 %v537
    %616 = vmatprep.subr.bf16.mxu0 0
    %617 = vmatpush1.bf16.msra.mxu0 %v538
    %618 = vmatprep.subr.bf16.mxu0 0
    %619 = vmatpush1.bf16.msra.mxu0 %v539
    %620 = vmatprep.mubr.bf16.mxu0 %v381
    %621 = vmatmul.mubr.bf16.gmra.mrb[0].mxu0 %v380
    %v622 = vpop.f32.mrb[0].mxu0
    %v623 = vadd.f32 %v354, %v622
    %v624 = vpop.f32.mrb[0].mxu0
    %v625 = vpop.f32.mrb[0].mxu0
    %v626 = vadd.f32 %v354, %v625
    %v627 = vpop.f32.mrb[0].mxu0
    %628 = vmatprep.mubr.bf16.mxu0 %v385
    %629 = vmatmul.mubr.bf16.gmra.mrb[0].mxu0 %v384
    %v630 = vpop.f32.mrb[0].mxu0
    %v631 = vadd.f32 %v354, %v630
    %v632 = vpop.f32.mrb[0].mxu0
    %v633 = vpop.f32.mrb[0].mxu0
    %v634 = vadd.f32 %v354, %v633
    %v635 = vpop.f32.mrb[0].mxu0
    %636 = vdwg.mxu0
    %637 = vmatprep.subr.bf16.mxu0 0
    %638 = vmatpush1.bf16.msra.mxu0 %v540
    %639 = vmatprep.subr.bf16.mxu0 0
    %640 = vmatpush1.bf16.msra.mxu0 %v541
    %641 = vmatprep.subr.bf16.mxu0 0
    %642 = vmatpush1.bf16.msra.mxu0 %v542
    %643 = vmatprep.subr.bf16.mxu0 0
    %644 = vmatpush1.bf16.msra.mxu0 %v543
    %645 = vmatprep.subr.bf16.mxu0 0
    %646 = vmatpush1.bf16.msra.mxu0 %v544
    %647 = vmatprep.subr.bf16.mxu0 0
    %648 = vmatpush1.bf16.msra.mxu0 %v545
    %649 = vmatprep.subr.bf16.mxu0 0
    %650 = vmatpush1.bf16.msra.mxu0 %v546
    %651 = vmatprep.subr.bf16.mxu0 0
    %652 = vmatpush1.bf16.msra.mxu0 %v547
    %653 = vmatprep.subr.bf16.mxu0 0
    %654 = vmatpush1.bf16.msra.mxu0 %v548
    %655 = vmatprep.subr.bf16.mxu0 0
    %656 = vmatpush1.bf16.msra.mxu0 %v549
    %657 = vmatprep.subr.bf16.mxu0 0
    %658 = vmatpush1.bf16.msra.mxu0 %v550
    %659 = vmatprep.subr.bf16.mxu0 0
    %660 = vmatpush1.bf16.msra.mxu0 %v551
    %661 = vmatprep.subr.bf16.mxu0 0
    %662 = vmatpush1.bf16.msra.mxu0 %v552
    %663 = vmatprep.subr.bf16.mxu0 0
    %664 = vmatpush1.bf16.msra.mxu0 %v553
    %665 = vmatprep.subr.bf16.mxu0 0
    %666 = vmatpush1.bf16.msra.mxu0 %v554
    %667 = vmatprep.subr.bf16.mxu0 0
    %668 = vmatpush1.bf16.msra.mxu0 %v555
    %669 = vmatprep.mubr.bf16.mxu0 %v383
    %670 = vmatmul.mubr.bf16.gmra.mrb[0].mxu0 %v382
    %v671 = vpop.f32.mrb[0].mxu0
    %v672 = vadd.f32 %v623, %v671
    %v673 = vpop.f32.mrb[0].mxu0
    %v674 = vpop.f32.mrb[0].mxu0
    %v675 = vadd.f32 %v626, %v674
    %v676 = vpop.f32.mrb[0].mxu0
    %677 = vmatprep.mubr.bf16.mxu0 %v387
    %678 = vmatmul.mubr.bf16.gmra.mrb[0].mxu0 %v386
    %v679 = vpop.f32.mrb[0].mxu0
    %v680 = vadd.f32 %v631, %v679
    %v681 = vpop.f32.mrb[0].mxu0
    %v682 = vpop.f32.mrb[0].mxu0
    %v683 = vadd.f32 %v634, %v682
    %v684 = vpop.f32.mrb[0].mxu0
    %685 = vdwg.mxu0
    %vm686 = vcmask 523264
    %687 = vst.msk [vmem:[#allocation4] sm:$0xff] %vm686, %v672
    %688 = vst.msk [vmem:[#allocation4 + $0x8] sm:$0xff] %vm686, %v675
    %689 = vst.msk [vmem:[#allocation4 + $0x10] sm:$0xff] %vm686, %v680
    %690 = vst.msk [vmem:[#allocation4 + $0x18] sm:$0xff] %vm686, %v683
    // Predicated region
    $region26: #{_forward.1} parent=1 // pred_check
      _
    $region27: #{_forward.1} parent=1 // pred_check_branch
      %692 = sbr.rel (0) target = $region29
    $region28: #{_forward.1} parent=1 // pred_region
      %s694 = ssub.s32 2048, 2048
      %695 = vsyncadd [#allocation3], %s694
      %s696 = sshll.u32 [#allocation2], 4
      %s697 = int_to_ptr.vmem [resolvable:$true] %s696
      %702 = dma.vmem_to_hbm [thread:$0]  %s697, 2048, %s6, [#allocation3], 128, 128, 8
    $region29: #{_forward.1} parent=1 // pred_fallthru
      _
    // Predicated region
    $region30: #{_forward.1} parent=1 // pred_check
      _
    $region31: #{_forward.1} parent=1 // pred_check_branch
      %704 = sbr.rel (0) target = $region33
    $region32: #{_forward.1} parent=1 // pred_region
      %s706 = ssub.s32 512, 512
      %707 = vsyncadd [#allocation5], %s706
      %s708 = sshll.u32 [#allocation4], 4
      %s709 = int_to_ptr.vmem [resolvable:$true] %s708
      %714 = dma.vmem_to_hbm [thread:$0]  %s709, 512, %s7, [#allocation5], 128, 128, 8
    $region33: #{_forward.1} parent=1 // pred_fallthru
      _
    // Predicated region
    $region34: #{_forward.1} parent=1 // pred_check
      _
    $region35: #{_forward.1} parent=1 // pred_check_branch
      %716 = sbr.rel (0) target = $region37
    $region36: #{_forward.1} parent=1 // pred_region
      %717 = dma.done [#allocation3], 2048
    $region37: #{_forward.1} parent=1 // pred_fallthru
      _
    // Predicated region
    $region38: #{_forward.1} parent=1 // pred_check
      _
    $region39: #{_forward.1} parent=1 // pred_check_branch
      %719 = sbr.rel (0) target = $region41
    $region40: #{_forward.1} parent=1 // pred_region
      %720 = dma.done [#allocation5], 512
    $region41: #{_forward.1} parent=1 // pred_fallthru
      _
    %721 = vsyncpa [#allocation3], 1
    %722 = vsyncpa [#allocation5], 1

</llo_original>
